<compile_context>
chip_gen: v7x
topology: tpu7x:2x2x1
jax: 0.10.0
libtpu: 0.0.40
codegen_flags: <defaults>
</compile_context>

<pallas_src>
import jax
import jax.numpy as jnp
from jax.experimental import pallas as pl
from jax.experimental.pallas import tpu as pltpu


# ---- GELU: erf via Abramowitz & Stegun 7.1.26 --------------------------------
# (|err| < 1.5e-7 exactly; ~1e-4 with the approx EUP reciprocal — both are far
#  inside the bf16-matmul tolerance of the self-test.)
_ERF_P = 0.3275911
_ERF_A1 = 0.254829592
_ERF_A2 = -0.284496736
_ERF_A3 = 1.421413741
_ERF_A4 = -1.453152027
_ERF_A5 = 1.061405429
_INV_SQRT2 = 0.7071067811865476


def _erf_approx(z):
    a = jnp.abs(z)
    # EUP reciprocal (same unit as the exp below) instead of a VALU divide.
    t = pl.reciprocal(1.0 + _ERF_P * a, approx=True)
    poly = t * (_ERF_A1 + t * (_ERF_A2 + t * (_ERF_A3 + t * (_ERF_A4 + t * _ERF_A5))))
    e = 1.0 - poly * jnp.exp(-a * a)
    return jnp.where(z < 0.0, -e, e)


def _gelu_exact(x):
    # PyTorch nn.GELU() default (approximate='none'): 0.5 * x * (1 + erf(x/sqrt(2)))
    return 0.5 * x * (1.0 + _erf_approx(x * _INV_SQRT2))


# ---- fused FFN kernel ---------------------------------------------------------
def _ffn_kernel(x_ref, w1_ref, b1_ref, w2_ref, b2_ref, o_ref, acc_ref):
    k = pl.program_id(1)

    @pl.when(k == 0)
    def _init():
        acc_ref[...] = jnp.zeros_like(acc_ref)

    x = x_ref[...]                                                   # (TM, D) f32
    # bf16 MXU operands, f32 accumulation; bias add + GELU stay in f32.
    h = jnp.dot(x.astype(jnp.bfloat16), w1_ref[...],
                preferred_element_type=jnp.float32) + b1_ref[...]    # (TM, TH) f32
    h = _gelu_exact(h)
    acc_ref[...] += jnp.dot(h.astype(jnp.bfloat16), w2_ref[...],
                            preferred_element_type=jnp.float32)      # (TM, D) f32

    @pl.when(k == pl.num_programs(1) - 1)
    def _store():
        o_ref[...] = (acc_ref[...] + b2_ref[...]).astype(o_ref.dtype)


def _round_up(x, m):
    return ((x + m - 1) // m) * m


def feedforward_pallas(x, w1, b1, w2, b2, *, block_m=None, block_h=None):
    """x: (B, N, D); w1: (D, H); b1: (H,); w2: (H, D); b2: (D,)."""
    B, N, D = x.shape
    H = w1.shape[1]
    assert w1.shape == (D, H) and w2.shape == (H, D)
    assert b1.shape == (H,) and b2.shape == (D,)

    M = B * N
    x2 = x.reshape(M, D)                      # metadata-only reshape

    # Weights as bf16 (the kernel accumulates in f32); biases stay f32.
    w1b = w1.astype(jnp.bfloat16)
    w2b = w2.astype(jnp.bfloat16)
    b1r = b1.reshape(1, H).astype(jnp.float32)
    b2r = b2.reshape(1, D).astype(jnp.float32)

    # Row tiling: >= 2 grid steps so "parallel" can shard across v7x's 2 TCs,
    # rows a multiple of 8, cap at 256 (VMEM-safe on v7x; bump to 512 on
    # v6e/v5e for very large M if desired).
    if block_m is None:
        block_m = min(256, max(8, _round_up(pl.cdiv(M, 2), 8)))
    assert block_m % 8 == 0, "block_m must be a multiple of 8 (sublane tiling)"

    # Hidden tiling: keep the whole H resident for small/odd H, tile it for
    # production sizes (bounds weight + hidden VMEM to per-tile slabs).
    if block_h is None:
        block_h = 512 if (H > 1024 and H % 512 == 0) else H
    assert H % block_h == 0, "block_h must divide H"
    assert block_h == H or block_h % 128 == 0, "block_h must be lane-dense"

    n_m = pl.cdiv(M, block_m)
    n_h = H // block_h
    m_pad = n_m * block_m
    if m_pad != M:
        # Only triggers when M doesn't tile evenly (not in the demo).
        x2 = jnp.pad(x2, ((0, m_pad - M), (0, 0)))

    # Constant-index blocks need only a single VMEM buffer; tiles that change
    # along the hidden axis keep the default double buffering.
    w_bufs = 1 if n_h == 1 else 2
    w_mode = pl.Buffered(w_bufs)

    # Explicit VMEM budget (with headroom) instead of relying on defaults.
    est = (
        2 * block_m * D * 4                      # x tile (double buffered)
        + 2 * block_m * D * 4                    # out tile (double buffered)
        + block_m * D * 4                        # f32 accumulator scratch
        + 2 * block_m * block_h * 4              # hidden slab headroom
        + w_bufs * 2 * (D * block_h) * 2         # W1 + W2 tiles (bf16)
        + w_bufs * block_h * 4 + D * 4           # biases
    )
    vmem_limit = int(min(max(2 * est, 16 * 2**20), 48 * 2**20))

    cost = pl.CostEstimate(
        flops=4 * M * D * H,                      # two matmuls: 2*M*D*H each
        transcendentals=M * H,                    # one exp per hidden element
        bytes_accessed=2 * M * D * 4 + 2 * D * H * 2 + (H + D) * 4,
    )

    out = pl.pallas_call(
        _ffn_kernel,
        out_shape=jax.ShapeDtypeStruct((m_pad, D), x.dtype),
        grid_spec=pltpu.PrefetchScalarGridSpec(
            num_scalar_prefetch=0,
            grid=(n_m, n_h),                      # reduction (H) axis last
            in_specs=[
                pl.BlockSpec((block_m, D), lambda i, k: (i, 0)),        # x rows
                pl.BlockSpec((D, block_h), lambda i, k: (0, k),
                             pipeline_mode=w_mode),                     # W1 tile
                pl.BlockSpec((1, block_h), lambda i, k: (0, k),
                             pipeline_mode=w_mode),                     # b1 tile
                pl.BlockSpec((block_h, D), lambda i, k: (k, 0),
                             pipeline_mode=w_mode),                     # W2 tile
                pl.BlockSpec((1, D), lambda i, k: (0, 0),
                             pipeline_mode=pl.Buffered(1)),             # b2
            ],
            out_specs=pl.BlockSpec((block_m, D), lambda i, k: (i, 0)),
            scratch_shapes=[pltpu.VMEM((block_m, D), jnp.float32)],     # acc
        ),
        compiler_params=pltpu.CompilerParams(
            dimension_semantics=("parallel", "arbitrary"),
            vmem_limit_bytes=vmem_limit,
        ),
        cost_estimate=cost,
    )(x2, w1b, b1r, w2b, b2r)

    if m_pad != M:
        out = out[:M]
    return out.reshape(B, N, D)


def feedforward_reference(x, w1, b1, w2, b2):
    """Pure-JAX mirror of the PyTorch forward pass (dropout p=0 == identity)."""
    h = jnp.dot(x, w1, precision=jax.lax.Precision.HIGHEST) + b1
    h = jax.nn.gelu(h, approximate=False)        # exact erf GELU, like nn.GELU()
    return jnp.dot(h, w2, precision=jax.lax.Precision.HIGHEST) + b2


if __name__ == "__main__":
    # Module config: FeedForward(dim=128, hidden_dim=256, dropout=0.0).
    # Dims are multiples of 128 so all kernel loads/stores are lane-dense;
    # M = 16 rows tile evenly into 2 parallel 8-row blocks (no padding path).
    DIM, HIDDEN = 128, 256
    B, N = 2, 8

    key = jax.random.PRNGKey(0)
    kx, kw1, kb1, kw2, kb2 = jax.random.split(key, 5)

    x = jax.random.normal(kx, (B, N, DIM), dtype=jnp.float32)
    # Deterministic synthetic parameters, (in, out) layout, nn.Linear-like scale.
    w1 = jax.random.normal(kw1, (DIM, HIDDEN), dtype=jnp.float32) * (DIM ** -0.5)
    b1 = jax.random.normal(kb1, (HIDDEN,), dtype=jnp.float32) * 0.05
    w2 = jax.random.normal(kw2, (HIDDEN, DIM), dtype=jnp.float32) * (HIDDEN ** -0.5)
    b2 = jax.random.normal(kb2, (DIM,), dtype=jnp.float32) * 0.05

    out = feedforward_pallas(x, w1, b1, w2, b2)
    out = jax.block_until_ready(out)

    ref = feedforward_reference(x, w1, b1, w2, b2)
    assert out.shape == (B, N, DIM)
    # bf16 MXU operands with f32 accumulation -> ~1e-2 relative numerics.
    max_err = float(jnp.max(jnp.abs(out - ref)))
    assert jnp.allclose(out, ref, atol=2e-2, rtol=2e-2), (
        f"mismatch vs reference (max abs err {max_err})")

    # TODO(synk): training-mode stochastic Dropout (p > 0) not implemented; p=0.0/eval is identity.
    print("KERNEL_OK")
</pallas_src>

<mosaic_0001>
module attributes {stable_mosaic.version = 11 : i64} {
  func.func @_ffn_kernel(%arg0: i32, %arg1: i32, %arg2: memref<8x128xf32, #tpu.memory_space<vmem>>, %arg3: memref<128x256xbf16, #tpu.memory_space<vmem>>, %arg4: memref<1x256xf32, #tpu.memory_space<vmem>>, %arg5: memref<256x128xbf16, #tpu.memory_space<vmem>>, %arg6: memref<1x128xf32, #tpu.memory_space<vmem>>, %arg7: memref<8x128xf32, #tpu.memory_space<vmem>>, %arg8: memref<8x128xf32, #tpu.memory_space<vmem>>) attributes {dimension_semantics = [#tpu.dimension_semantics<parallel>, #tpu.dimension_semantics<arbitrary>], iteration_bounds = array<i64: 2, 1>, scalar_prefetch = 0 : i64, scratch_operands = 1 : i64, tpu.core_type = #tpu.core_type<tc>, window_params = [{transform_indices = @transform_0, window_bounds = array<i64: 8, 128>}, {pipeline_mode = #tpu.pipeline_mode<synchronous>, transform_indices = @transform_1, window_bounds = array<i64: 128, 256>}, {pipeline_mode = #tpu.pipeline_mode<synchronous>, transform_indices = @transform_2, window_bounds = array<i64: 1, 256>}, {pipeline_mode = #tpu.pipeline_mode<synchronous>, transform_indices = @transform_3, window_bounds = array<i64: 256, 128>}, {pipeline_mode = #tpu.pipeline_mode<synchronous>, transform_indices = @transform_4, window_bounds = array<i64: 1, 128>}, {transform_indices = @transform_5, window_bounds = array<i64: 8, 128>}]} {
    %c0_i32 = arith.constant 0 : i32
    %0 = arith.cmpi eq, %arg1, %c0_i32 : i32
    %1 = arith.extui %0 : i1 to i32
    %c0_i32_0 = arith.constant 0 : i32
    %2 = arith.cmpi ne, %1, %c0_i32_0 : i32
    scf.if %2 {
      %cst_29 = arith.constant 0.000000e+00 : f32
      %58 = vector.broadcast %cst_29 : f32 to vector<8x128xf32>
      %c0_30 = arith.constant 0 : index
      %c0_31 = arith.constant 0 : index
      %59 = vector.load %arg8[%c0_30, %c0_31] : memref<8x128xf32, #tpu.memory_space<vmem>>, vector<8x128xf32>
      tpu.vector_store %arg8[%c0_30, %c0_31], %58 {strides = array<i32>} : memref<8x128xf32, #tpu.memory_space<vmem>>, vector<8x128xf32>,
    } else {
    }
    %c0 = arith.constant 0 : index
    %c0_1 = arith.constant 0 : index
    %3 = vector.load %arg2[%c0, %c0_1] : memref<8x128xf32, #tpu.memory_space<vmem>>, vector<8x128xf32>
    %4 = arith.truncf %3 : vector<8x128xf32> to vector<8x128xbf16>
    %c0_2 = arith.constant 0 : index
    %c0_3 = arith.constant 0 : index
    %5 = vector.load %arg3[%c0_2, %c0_3] : memref<128x256xbf16, #tpu.memory_space<vmem>>, vector<128x256xbf16>
    %cst = arith.constant dense<0.000000e+00> : vector<8x256xf32>
    %6 = tpu.matmul %4, %5, %cst {dimension_numbers = #tpu.dot_dimension_numbers<[1], [0], [0], [1], [0, 0, 1, 1], [], []>} : vector<8x128xbf16>, vector<128x256xbf16>, vector<8x256xf32> -> vector<8x256xf32>
    %c0_4 = arith.constant 0 : index
    %c0_5 = arith.constant 0 : index
    %7 = vector.load %arg4[%c0_4, %c0_5] : memref<1x256xf32, #tpu.memory_space<vmem>>, vector<1x256xf32>
    %8 = vector.broadcast %7 : vector<1x256xf32> to vector<8x256xf32>
    %9 = arith.addf %6, %8 : vector<8x256xf32>
    %cst_6 = arith.constant 5.000000e-01 : f32
    %10 = vector.broadcast %cst_6 : f32 to vector<8x256xf32>
    %11 = arith.mulf %10, %9 : vector<8x256xf32>
    %cst_7 = arith.constant 0.707106769 : f32
    %12 = vector.broadcast %cst_7 : f32 to vector<8x256xf32>
    %13 = arith.mulf %9, %12 : vector<8x256xf32>
    %14 = math.absf %13 : vector<8x256xf32>
    %cst_8 = arith.constant 0.327591091 : f32
    %15 = vector.broadcast %cst_8 : f32 to vector<8x256xf32>
    %16 = arith.mulf %15, %14 : vector<8x256xf32>
    %cst_9 = arith.constant 1.000000e+00 : f32
    %17 = vector.broadcast %cst_9 : f32 to vector<8x256xf32>
    %18 = arith.addf %17, %16 : vector<8x256xf32>
    %19 = tpu.reciprocal %18 {approx = true} : vector<8x256xf32> -> vector<8x256xf32>
    %cst_10 = arith.constant 1.06140542 : f32
    %20 = vector.broadcast %cst_10 : f32 to vector<8x256xf32>
    %21 = arith.mulf %19, %20 : vector<8x256xf32>
    %cst_11 = arith.constant -1.45315206 : f32
    %22 = vector.broadcast %cst_11 : f32 to vector<8x256xf32>
    %23 = arith.addf %22, %21 : vector<8x256xf32>
    %24 = arith.mulf %19, %23 : vector<8x256xf32>
    %cst_12 = arith.constant 1.42141378 : f32
    %25 = vector.broadcast %cst_12 : f32 to vector<8x256xf32>
    %26 = arith.addf %25, %24 : vector<8x256xf32>
    %27 = arith.mulf %19, %26 : vector<8x256xf32>
    %cst_13 = arith.constant -0.284496725 : f32
    %28 = vector.broadcast %cst_13 : f32 to vector<8x256xf32>
    %29 = arith.addf %28, %27 : vector<8x256xf32>
    %30 = arith.mulf %19, %29 : vector<8x256xf32>
    %cst_14 = arith.constant 0.254829586 : f32
    %31 = vector.broadcast %cst_14 : f32 to vector<8x256xf32>
    %32 = arith.addf %31, %30 : vector<8x256xf32>
    %33 = arith.mulf %19, %32 : vector<8x256xf32>
    %cst_15 = arith.constant 0.000000e+00 : f32
    %34 = vector.broadcast %cst_15 : f32 to vector<8x256xf32>
    %35 = arith.subf %34, %14 : vector<8x256xf32>
    %36 = arith.mulf %35, %14 : vector<8x256xf32>
    %37 = math.exp %36 : vector<8x256xf32>
    %38 = arith.mulf %33, %37 : vector<8x256xf32>
    %cst_16 = arith.constant 1.000000e+00 : f32
    %39 = vector.broadcast %cst_16 : f32 to vector<8x256xf32>
    %40 = arith.subf %39, %38 : vector<8x256xf32>
    %cst_17 = arith.constant 0.000000e+00 : f32
    %41 = vector.broadcast %cst_17 : f32 to vector<8x256xf32>
    %42 = arith.cmpf olt, %13, %41 : vector<8x256xf32>
    %cst_18 = arith.constant 0.000000e+00 : f32
    %43 = vector.broadcast %cst_18 : f32 to vector<8x256xf32>
    %44 = arith.subf %43, %40 : vector<8x256xf32>
    %45 = arith.select %42, %44, %40 : vector<8x256xi1>, vector<8x256xf32>
    %cst_19 = arith.constant 1.000000e+00 : f32
    %46 = vector.broadcast %cst_19 : f32 to vector<8x256xf32>
    %47 = arith.addf %46, %45 : vector<8x256xf32>
    %48 = arith.mulf %11, %47 : vector<8x256xf32>
    %c0_20 = arith.constant 0 : index
    %c0_21 = arith.constant 0 : index
    %49 = vector.load %arg8[%c0_20, %c0_21] : memref<8x128xf32, #tpu.memory_space<vmem>>, vector<8x128xf32>
    %50 = arith.truncf %48 : vector<8x256xf32> to vector<8x256xbf16>
    %c0_22 = arith.constant 0 : index
    %c0_23 = arith.constant 0 : index
    %51 = vector.load %arg5[%c0_22, %c0_23] : memref<256x128xbf16, #tpu.memory_space<vmem>>, vector<256x128xbf16>
    %cst_24 = arith.constant dense<0.000000e+00> : vector<8x128xf32>
    %52 = tpu.matmul %50, %51, %cst_24 {dimension_numbers = #tpu.dot_dimension_numbers<[1], [0], [0], [1], [0, 0, 1, 1], [], []>} : vector<8x256xbf16>, vector<256x128xbf16>, vector<8x128xf32> -> vector<8x128xf32>
    %53 = arith.addf %49, %52 : vector<8x128xf32>
    %c0_25 = arith.constant 0 : index
    %c0_26 = arith.constant 0 : index
    %54 = vector.load %arg8[%c0_25, %c0_26] : memref<8x128xf32, #tpu.memory_space<vmem>>, vector<8x128xf32>
    tpu.vector_store %arg8[%c0_25, %c0_26], %53 {strides = array<i32>} : memref<8x128xf32, #tpu.memory_space<vmem>>, vector<8x128xf32>,
    %c0_i32_27 = arith.constant 0 : i32
    %55 = arith.cmpi eq, %arg1, %c0_i32_27 : i32
    %56 = arith.extui %55 : i1 to i32
    %c0_i32_28 = arith.constant 0 : i32
    %57 = arith.cmpi ne, %56, %c0_i32_28 : i32
    scf.if %57 {
      %c0_29 = arith.constant 0 : index
      %c0_30 = arith.constant 0 : index
      %58 = vector.load %arg8[%c0_29, %c0_30] : memref<8x128xf32, #tpu.memory_space<vmem>>, vector<8x128xf32>
      %c0_31 = arith.constant 0 : index
      %c0_32 = arith.constant 0 : index
      %59 = vector.load %arg6[%c0_31, %c0_32] : memref<1x128xf32, #tpu.memory_space<vmem>>, vector<1x128xf32>
      %60 = vector.broadcast %59 : vector<1x128xf32> to vector<8x128xf32>
      %61 = arith.addf %58, %60 : vector<8x128xf32>
      %c0_33 = arith.constant 0 : index
      %c0_34 = arith.constant 0 : index
      %62 = vector.load %arg7[%c0_33, %c0_34] : memref<8x128xf32, #tpu.memory_space<vmem>>, vector<8x128xf32>
      tpu.vector_store %arg7[%c0_33, %c0_34], %61 {strides = array<i32>} : memref<8x128xf32, #tpu.memory_space<vmem>>, vector<8x128xf32>,
    } else {
    }
    return
  }
  func.func @transform_0(%arg0: i32, %arg1: i32) -> (i32, i32) {
    %c0_i32 = arith.constant 0 : i32
    %c0_i32_0 = arith.constant 0 : i32
    return %arg0, %c0_i32 : i32, i32
  }
  func.func @transform_1(%arg0: i32, %arg1: i32) -> (i32, i32) {
    %c0_i32 = arith.constant 0 : i32
    %c0_i32_0 = arith.constant 0 : i32
    return %c0_i32, %arg1 : i32, i32
  }
  func.func @transform_2(%arg0: i32, %arg1: i32) -> (i32, i32) {
    %c0_i32 = arith.constant 0 : i32
    %c0_i32_0 = arith.constant 0 : i32
    return %c0_i32, %arg1 : i32, i32
  }
  func.func @transform_3(%arg0: i32, %arg1: i32) -> (i32, i32) {
    %c0_i32 = arith.constant 0 : i32
    %c0_i32_0 = arith.constant 0 : i32
    return %arg1, %c0_i32 : i32, i32
  }
  func.func @transform_4(%arg0: i32, %arg1: i32) -> (i32, i32) {
    %c0_i32 = arith.constant 0 : i32
    %c0_i32_0 = arith.constant 0 : i32
    %c0_i32_1 = arith.constant 0 : i32
    return %c0_i32, %c0_i32_0 : i32, i32
  }
  func.func @transform_5(%arg0: i32, %arg1: i32) -> (i32, i32) {
    %c0_i32 = arith.constant 0 : i32
    %c0_i32_0 = arith.constant 0 : i32
    return %arg0, %c0_i32 : i32, i32
  }
}

</mosaic_0001>

<llo_original>
// kernel: tpu_custom_call.1
$region0: #{tpu_custom_call.1}
  #allocation0 [shape = 'u32[]', space=smem, size = 0x4, offset = 0x4, fixed_abs, tag = 'smem constant byte address 0x4 - core index']
  #allocation1 [shape = 'u32[144,128]{1,0:T(1,128)}', space=vmem, size = 0x12000, scoped, tag = 'internal scratch']
  #allocation2 [shape = 'f32[8,128]{1,0:T(8,128)}', space=vmem, size = 0x1000, scoped, tag = 'scratch operand']
  %s0 = inlined_call_operand.hbm [shape: f32[16,128], index: 0, kind: input, shape index: {}]
  %s1 = inlined_call_operand.hbm [shape: bf16[128,256], index: 1, kind: input, shape index: {}]
  %s2 = inlined_call_operand.vmem [shape: f32[1,256], index: 2, kind: input, shape index: {}]
  %s3 = inlined_call_operand.hbm [shape: bf16[256,128], index: 3, kind: input, shape index: {}]
  %s4 = inlined_call_operand.vmem [shape: f32[1,128], index: 4, kind: input, shape index: {}]
  %s5 = inlined_call_operand.hbm [shape: f32[16,128], index: 5, kind: output, shape index: {}]
  %s6 = sld [smem:[#allocation0]]
  $region73: #{tpu_custom_call.1} parent=0
    _
  %s8 = ssub.s32 1, %s6
  %s9 = scalar_select 0, %s8, %s6
  $region1: #{tpu_custom_call.1} parent=0
    #allocation3 [shape = 'u8[8192]{0}', space=vmem, size = 0x2000, scoped, tag = 'input window, operand 0']
    #allocation4 [shape = 's32[2]{0}', space=sflag, size = 0x8, scoped, tag = 'scoped memory for tpu_custom_call.1']
    #allocation5 [shape = 's32[2]{0}', space=sflag, size = 0x8, scoped, tag = 'scoped memory for tpu_custom_call.1']
    #allocation6 [shape = 'u8[65536]{0}', space=vmem, size = 0x10000, scoped, tag = 'input window, operand 1, single buffered']
    #allocation7 [shape = 's32[1]{0}', space=sflag, size = 0x4, scoped, tag = 'scoped memory for tpu_custom_call.1']
    #allocation8 [shape = 'u8[65536]{0}', space=vmem, size = 0x10000, scoped, tag = 'input window, operand 3, single buffered']
    #allocation9 [shape = 'u8[8192]{0}', space=vmem, size = 0x2000, scoped, tag = 'output window, operand 0']
    %10 = vsyncpa [#allocation4], 0
    %s11 = scalar_lea.sflag [#allocation4], 1
    %12 = vsyncpa %s11, 0
    %13 = vsyncpa [#allocation7], 0
    %14 = vsyncpa [#allocation5], 0
    %s15 = scalar_lea.sflag [#allocation5], 1
    %16 = vsyncpa %s15, 0
    loop: start=0, step=1, limit=4
    $region2: #{tpu_custom_call.1} parent=1 // loop_pre_header
      _
    $region3: #{tpu_custom_call.1} parent=1 // loop_header
      %s18 = sphi 0, %s22
      %p19 = scmp.ge.s32.totalorder %s18, 4
      %s25 = sphi 0, %s37
      %s26 = sphi 0, %s33
      %s27 = sphi 0, %s25
      %s28 = sphi 0, %s26
      %s29 = sphi 0, %s27
      %s30 = sphi 0, %s28
      %s40 = sphi 0, %s42
      %s43 = sphi 0, %s40
      %s44 = sphi 0, %s43
      %s60 = sphi 0, %s44
      %s66 = sphi 0, %s68
      %s69 = sphi 0, %s66
      %s70 = sphi 0, %s69
      %s86 = sphi 0, %s70
      %s92 = sphi 0, %s94
      %s95 = sphi 0, %s92
      %s96 = sphi 0, %s95
      %s112 = sphi 0, %s96
      %s118 = sphi 0, %s120
      %s121 = sphi 0, %s118
      %s122 = sphi 0, %s121
      %s138 = sphi 0, %s122
      %s142 = sphi 0, %s142
      %s144 = sphi 0, %s142
      %s145 = sphi 0, %s144
      %s159 = sphi 0, %s145
      %s165 = sphi 0, %s167
      %s168 = sphi 0, %s165
      %s169 = sphi 0, %s168
      %s185 = sphi 0, %s169
    $region4: #{tpu_custom_call.1} parent=1 // loop_header_branch
      %21 = sbr.rel (%p19) target = $region8
    $region5: #{tpu_custom_call.1} parent=1 // loop_body
      %s23 = ssub.s32 %s18, 1
      %s24 = ssub.s32 %s18, 2
      %s31 = sadd.s32 1, %s26
      %p32 = scmp.ge.s32.totalorder %s31, 1
      %s33 = scalar_select %p32, 0, %s31
      %s34 = sadd.s32 1, %s25
      %s35 = scalar_select %p32, %s34, %s25
      %p36 = scmp.ge.s32.totalorder %s35, 2
      %s37 = scalar_select %p36, 0, %s35
      %s38 = ssub.s32 %s25, %s37
      %p39 = scmp.eq.s32.totalorder %s38, 0
      %s41 = sadd.s32 %s40, 1
      %s42 = scalar_select %p39, %s40, %s41
      %p45 = pneg %p39
      %p46 = scmp.eq.s32.totalorder %s18, 1
      %p47 = por %p45, %p46
      %p48 = scmp.ne.s32.totalorder %s40, %s43
      %p49 = scmp.eq.s32.totalorder %s18, 0
      %p50 = por %p48, %p49
      %p51 = scmp.ne.s32.totalorder %s40, %s43
      %p52 = scmp.eq.s32.totalorder %s23, 1
      %p53 = por %p51, %p52
      %p54 = scmp.ne.s32.totalorder %s43, %s44
      %p55 = scmp.eq.s32.totalorder %s23, 0
      %p56 = por %p54, %p55
      %p57 = scmp.ne.s32.totalorder %s43, %s44
      %p58 = scmp.eq.s32.totalorder %s24, 1
      %p59 = por %p57, %p58
      %p61 = scmp.ne.s32.totalorder %s44, %s60
      %p62 = scmp.eq.s32.totalorder %s24, 0
      %p63 = por %p61, %p62
      %s64 = ssub.s32 %s26, %s33
      %p65 = scmp.eq.s32.totalorder %s64, 0
      %s67 = sadd.s32 %s66, 1
      %s68 = scalar_select %p65, %s66, %s67
      %p71 = pneg %p65
      %p72 = scmp.eq.s32.totalorder %s18, 1
      %p73 = por %p71, %p72
      %p74 = scmp.ne.s32.totalorder %s66, %s69
      %p75 = scmp.eq.s32.totalorder %s18, 0
      %p76 = por %p74, %p75
      %p77 = scmp.ne.s32.totalorder %s66, %s69
      %p78 = scmp.eq.s32.totalorder %s23, 1
      %p79 = por %p77, %p78
      %p80 = scmp.ne.s32.totalorder %s69, %s70
      %p81 = scmp.eq.s32.totalorder %s23, 0
      %p82 = por %p80, %p81
      %p83 = scmp.ne.s32.totalorder %s69, %s70
      %p84 = scmp.eq.s32.totalorder %s24, 1
      %p85 = por %p83, %p84
      %p87 = scmp.ne.s32.totalorder %s70, %s86
      %p88 = scmp.eq.s32.totalorder %s24, 0
      %p89 = por %p87, %p88
      %s90 = ssub.s32 %s26, %s33
      %p91 = scmp.eq.s32.totalorder %s90, 0
      %s93 = sadd.s32 %s92, 1
      %s94 = scalar_select %p91, %s92, %s93
      %p97 = pneg %p91
      %p98 = scmp.eq.s32.totalorder %s18, 1
      %p99 = por %p97, %p98
      %p100 = scmp.ne.s32.totalorder %s92, %s95
      %p101 = scmp.eq.s32.totalorder %s18, 0
      %p102 = por %p100, %p101
      %p103 = scmp.ne.s32.totalorder %s92, %s95
      %p104 = scmp.eq.s32.totalorder %s23, 1
      %p105 = por %p103, %p104
      %p106 = scmp.ne.s32.totalorder %s95, %s96
      %p107 = scmp.eq.s32.totalorder %s23, 0
      %p108 = por %p106, %p107
      %p109 = scmp.ne.s32.totalorder %s95, %s96
      %p110 = scmp.eq.s32.totalorder %s24, 1
      %p111 = por %p109, %p110
      %p113 = scmp.ne.s32.totalorder %s96, %s112
      %p114 = scmp.eq.s32.totalorder %s24, 0
      %p115 = por %p113, %p114
      %s116 = ssub.s32 %s26, %s33
      %p117 = scmp.eq.s32.totalorder %s116, 0
      %s119 = sadd.s32 %s118, 1
      %s120 = scalar_select %p117, %s118, %s119
      %p123 = pneg %p117
      %p124 = scmp.eq.s32.totalorder %s18, 1
      %p125 = por %p123, %p124
      %p126 = scmp.ne.s32.totalorder %s118, %s121
      %p127 = scmp.eq.s32.totalorder %s18, 0
      %p128 = por %p126, %p127
      %p129 = scmp.ne.s32.totalorder %s118, %s121
      %p130 = scmp.eq.s32.totalorder %s23, 1
      %p131 = por %p129, %p130
      %p132 = scmp.ne.s32.totalorder %s121, %s122
      %p133 = scmp.eq.s32.totalorder %s23, 0
      %p134 = por %p132, %p133
      %p135 = scmp.ne.s32.totalorder %s121, %s122
      %p136 = scmp.eq.s32.totalorder %s24, 1
      %p137 = por %p135, %p136
      %p139 = scmp.ne.s32.totalorder %s122, %s138
      %p140 = scmp.eq.s32.totalorder %s24, 0
      %p141 = por %p139, %p140
      %s143 = sadd.s32 %s142, 1
      %p146 = scmp.eq.s32.totalorder %s18, 1
      %p147 = scmp.ne.s32.totalorder %s142, %s144
      %p148 = scmp.eq.s32.totalorder %s18, 0
      %p149 = por %p147, %p148
      %p150 = scmp.ne.s32.totalorder %s142, %s144
      %p151 = scmp.eq.s32.totalorder %s23, 1
      %p152 = por %p150, %p151
      %p153 = scmp.ne.s32.totalorder %s144, %s145
      %p154 = scmp.eq.s32.totalorder %s23, 0
      %p155 = por %p153, %p154
      %p156 = scmp.ne.s32.totalorder %s144, %s145
      %p157 = scmp.eq.s32.totalorder %s24, 1
      %p158 = por %p156, %p157
      %p160 = scmp.ne.s32.totalorder %s145, %s159
      %p161 = scmp.eq.s32.totalorder %s24, 0
      %p162 = por %p160, %p161
      %s163 = ssub.s32 %s25, %s37
      %p164 = scmp.eq.s32.totalorder %s163, 0
      %s166 = sadd.s32 %s165, 1
      %s167 = scalar_select %p164, %s165, %s166
      %p170 = pneg %p164
      %p171 = scmp.eq.s32.totalorder %s18, 1
      %p172 = por %p170, %p171
      %p173 = scmp.ne.s32.totalorder %s165, %s168
      %p174 = scmp.eq.s32.totalorder %s18, 0
      %p175 = por %p173, %p174
      %p176 = scmp.ne.s32.totalorder %s165, %s168
      %p177 = scmp.eq.s32.totalorder %s23, 1
      %p178 = por %p176, %p177
      %p179 = scmp.ne.s32.totalorder %s168, %s169
      %p180 = scmp.eq.s32.totalorder %s23, 0
      %p181 = por %p179, %p180
      %p182 = scmp.ne.s32.totalorder %s168, %s169
      %p183 = scmp.eq.s32.totalorder %s24, 1
      %p184 = por %p182, %p183
      %p186 = scmp.ne.s32.totalorder %s169, %s185
      %p187 = scmp.eq.s32.totalorder %s24, 0
      %p188 = por %p186, %p187
      %p189 = scmp.le.s32.totalorder 1, %s18
      %p190 = scmp.lt.s32.totalorder %s18, 3
      %p191 = pnand %p189, %p190
      %p192 = pneg %p191
      // Predicated region
      $region9: #{tpu_custom_call.1} parent=5 // pred_check
        _
      $region10: #{tpu_custom_call.1} parent=5 // pred_check_branch
        %194 = sbr.rel (%p191) target = $region12
      $region11: #{tpu_custom_call.1} parent=5 // pred_region
        %s195 = ssub.s32 %s18, 1
        // Predicated region
        $region13: #{tpu_custom_call.1} parent=11 // pred_check
          %p196 = pneg %p82
        $region14: #{tpu_custom_call.1} parent=11 // pred_check_branch
          %198 = sbr.rel (%p196) target = $region16
        $region15: #{tpu_custom_call.1} parent=11 // pred_region
          %s199 = smul.u32 2, %s28
          %s201 = ssub.s32 2048, 2048
          %202 = vsyncadd [#allocation7], %s201
          %s203 = smul.addr %s199, 64
          %s204 = scalar_lea.hbm %s1, %s203
          %s205 = sshll.u32 [#allocation6], 4
          %s206 = int_to_ptr.vmem [resolvable:$true] %s205
          %211 = dma.hbm_to_vmem [thread:$0]  %s204, 2048, %s206, [#allocation7], 128, 128, 8
        $region16: #{tpu_custom_call.1} parent=11 // pred_fallthru
          _
        // Predicated region
        $region17: #{tpu_custom_call.1} parent=11 // pred_check
          %p212 = pneg %p108
        $region18: #{tpu_custom_call.1} parent=11 // pred_check_branch
          %214 = sbr.rel (%p212) target = $region20
        $region19: #{tpu_custom_call.1} parent=11 // pred_region
          %s215 = smul.u32 2, %s28
          %p216 = scmp.lt.s32.totalorder %s215, 1
          %s217 = scalar_select %p216, %s215, 1
          %s218 = scalar_lea.vmem %s2, %s217
          %s219 = smul.u32 2, %s28
        $region20: #{tpu_custom_call.1} parent=11 // pred_fallthru
          _
        // Predicated region
        $region21: #{tpu_custom_call.1} parent=11 // pred_check
          %p220 = pneg %p134
        $region22: #{tpu_custom_call.1} parent=11 // pred_check_branch
          %222 = sbr.rel (%p220) target = $region24
        $region23: #{tpu_custom_call.1} parent=11 // pred_region
          %s223 = smul.u32 32, %s28
          %s225 = ssub.s32 2048, 2048
          %226 = vsyncadd [#allocation7], %s225
          %s227 = smul.addr %s223, 64
          %s228 = scalar_lea.hbm %s3, %s227
          %s229 = sshll.u32 [#allocation8], 4
          %s230 = int_to_ptr.vmem [resolvable:$true] %s229
          %235 = dma.hbm_to_vmem [thread:$0]  %s228, 2048, %s230, [#allocation7], 64, 64, 4
        $region24: #{tpu_custom_call.1} parent=11 // pred_fallthru
          _
        // Predicated region
        $region25: #{tpu_custom_call.1} parent=11 // pred_check
          %p236 = pneg %p155
        $region26: #{tpu_custom_call.1} parent=11 // pred_check_branch
          %238 = sbr.rel (%p236) target = $region28
        $region27: #{tpu_custom_call.1} parent=11 // pred_region
          _
        $region28: #{tpu_custom_call.1} parent=11 // pred_fallthru
          _
      $region12: #{tpu_custom_call.1} parent=5 // pred_fallthru
        _
      %p239 = scmp.lt.s32.totalorder %s18, 2
      // Predicated region
      $region29: #{tpu_custom_call.1} parent=5 // pred_check
        %p240 = pneg %p239
      $region30: #{tpu_custom_call.1} parent=5 // pred_check_branch
        %242 = sbr.rel (%p240) target = $region32
      $region31: #{tpu_custom_call.1} parent=5 // pred_region
        // Predicated region
        $region33: #{tpu_custom_call.1} parent=31 // pred_check
          %p243 = pneg %p50
        $region34: #{tpu_custom_call.1} parent=31 // pred_check_branch
          %245 = sbr.rel (%p243) target = $region36
        $region35: #{tpu_custom_call.1} parent=31 // pred_region
          %s246 = sand.u32 %s40, 1
          %s247 = scalar_lea.sflag [#allocation4], %s246
          %s248 = sand.u32 %s40, 1
          %s249 = smul.addr %s248, 8
          %s250 = scalar_lea.vmem [#allocation3], %s249
          %s252 = ssub.s32 128, 128
          %253 = vsyncadd %s247, %s252
          %s254 = smul.addr %s25, 128
          %s255 = scalar_lea.hbm %s0, %s254
          %s257 = sshll.u32 %s250, 4
          %s258 = int_to_ptr.vmem [resolvable:$true] %s257
          %260 = dma.hbm_to_vmem [thread:$0]  %s255, 128, %s258, %s247
        $region36: #{tpu_custom_call.1} parent=31 // pred_fallthru
          _
      $region32: #{tpu_custom_call.1} parent=5 // pred_fallthru
        _
      %p261 = scmp.le.s32.totalorder 1, %s18
      %p262 = scmp.lt.s32.totalorder %s18, 3
      %p263 = pnand %p261, %p262
      %p264 = pneg %p263
      // Predicated region
      $region37: #{tpu_custom_call.1} parent=5 // pred_check
        _
      $region38: #{tpu_custom_call.1} parent=5 // pred_check_branch
        %266 = sbr.rel (%p263) target = $region40
      $region39: #{tpu_custom_call.1} parent=5 // pred_region
        %s267 = ssub.s32 %s18, 1
        %s268 = sand.u32 %s43, 1
        %s269 = scalar_lea.sflag [#allocation4], %s268
        %s270 = sand.u32 %s43, 1
        %s271 = smul.addr %s270, 8
        %s272 = scalar_lea.vmem [#allocation3], %s271
        // Predicated region
        $region41: #{tpu_custom_call.1} parent=39 // pred_check
          %p273 = pneg %p56
        $region42: #{tpu_custom_call.1} parent=39 // pred_check_branch
          %275 = sbr.rel (%p273) target = $region44
        $region43: #{tpu_custom_call.1} parent=39 // pred_region
          %276 = dma.done %s269, 128
        $region44: #{tpu_custom_call.1} parent=39 // pred_fallthru
          _
        // Predicated region
        $region45: #{tpu_custom_call.1} parent=39 // pred_check
          %p277 = pneg %p82
        $region46: #{tpu_custom_call.1} parent=39 // pred_check_branch
          %279 = sbr.rel (%p277) target = $region48
        $region47: #{tpu_custom_call.1} parent=39 // pred_region
          %280 = dma.done [#allocation7], 2048
        $region48: #{tpu_custom_call.1} parent=39 // pred_fallthru
          _
        // Predicated region
        $region49: #{tpu_custom_call.1} parent=39 // pred_check
          %p281 = pneg %p134
        $region50: #{tpu_custom_call.1} parent=39 // pred_check_branch
          %283 = sbr.rel (%p281) target = $region52
        $region51: #{tpu_custom_call.1} parent=39 // pred_region
          %284 = dma.done [#allocation7], 2048
        $region52: #{tpu_custom_call.1} parent=39 // pred_fallthru
          _
        %s285 = sand.u32 %s43, 1
        %s286 = scalar_lea.sflag [#allocation4], %s285
        %s287 = sand.u32 %s43, 1
        %s288 = smul.addr %s287, 8
        %s289 = scalar_lea.vmem [#allocation3], %s288
        %p290 = pneg %p56
        %p291 = pneg %p53
        %p292 = pneg %p82
        %p293 = pneg %p79
        %s294 = smul.u32 2, %s28
        %p295 = scmp.lt.s32.totalorder %s294, 1
        %s296 = scalar_select %p295, %s294, 1
        %s297 = scalar_lea.vmem %s2, %s296
        %p298 = pneg %p108
        %p299 = pneg %p105
        %p300 = pneg %p134
        %p301 = pneg %p131
        %p302 = pneg %p155
        %p303 = pneg %p152
        %p304 = pneg %p181
        %p305 = pneg %p178
        %s306 = sand.u32 %s168, 1
        %s307 = scalar_lea.sflag [#allocation5], %s306
        %s308 = sand.u32 %s168, 1
        %s309 = smul.addr %s308, 8
        %s310 = scalar_lea.vmem [#allocation9], %s309
        %s311 = smul.u32 2, %s28
        %s312 = smul.u32 2, %s28
        %p313 = scmp.lt.s32.totalorder %s312, 1
        %s314 = scalar_select %p313, %s312, 1
        %s315 = scalar_lea.vmem %s2, %s314
        %s316 = smul.u32 2, %s28
        %s317 = smul.u32 32, %s28
        %p319 = scmp.eq.s32.totalorder %s28, 0
        // Predicated region
        $region53: #{tpu_custom_call.1} parent=39 // pred_check
          %p320 = pneg %p319
        $region54: #{tpu_custom_call.1} parent=39 // pred_check_branch
          %322 = sbr.rel (%p320) target = $region56
        $region55: #{tpu_custom_call.1} parent=39 // pred_region
          %323 = vst [vmem:[#allocation2] sm:$0xff] 0.0
        $region56: #{tpu_custom_call.1} parent=39 // pred_fallthru
          _
        %v324 = vld [vmem:[%s272] sm:$0xff]
        %v325 = vpack.c.bf16 %v324, %v324
        %v326 = vld [vmem:[#allocation6] sm:$0xff]
        %v327 = vld [vmem:[#allocation6 + $0x8] sm:$0xff]
        %v328 = vld [vmem:[#allocation6 + $0x10] sm:$0xff]
        %v329 = vld [vmem:[#allocation6 + $0x18] sm:$0xff]
        %v330 = vld [vmem:[#allocation6 + $0x20] sm:$0xff]
        %v331 = vld [vmem:[#allocation6 + $0x28] sm:$0xff]
        %v332 = vld [vmem:[#allocation6 + $0x30] sm:$0xff]
        %v333 = vld [vmem:[#allocation6 + $0x38] sm:$0xff]
        %v334 = vld [vmem:[#allocation6 + $0x40] sm:$0xff]
        %v335 = vld [vmem:[#allocation6 + $0x48] sm:$0xff]
        %v336 = vld [vmem:[#allocation6 + $0x50] sm:$0xff]
        %v337 = vld [vmem:[#allocation6 + $0x58] sm:$0xff]
        %v338 = vld [vmem:[#allocation6 + $0x60] sm:$0xff]
        %v339 = vld [vmem:[#allocation6 + $0x68] sm:$0xff]
        %v340 = vld [vmem:[#allocation6 + $0x70] sm:$0xff]
        %v341 = vld [vmem:[#allocation6 + $0x78] sm:$0xff]
        %v342 = vld [vmem:[%s315] sm:$0x3]
        %v344 = vlaneseq
        %v345 = vshrl.u32 %v344, 7
        %v346 = vsub.s32 0, %v345
        %v347 = vrot.slane %v342, %v346
        %v348 = vlaneseq
        %v349 = vshrl.u32 %v348, 7
        %v350 = vsub.s32 1, %v349
        %v351 = vrot.slane %v342, %v350
        %v370 = vunpack.c.l.b16 %v326
        %v371 = vunpack.c.h.b16 %v326
        %v372 = vunpack.c.l.b16 %v327
        %v373 = vunpack.c.h.b16 %v327
        %v374 = vunpack.c.l.b16 %v328
        %v375 = vunpack.c.h.b16 %v328
        %v376 = vunpack.c.l.b16 %v329
        %v377 = vunpack.c.h.b16 %v329
        %v378 = vunpack.c.l.b16 %v330
        %v379 = vunpack.c.h.b16 %v330
        %v380 = vunpack.c.l.b16 %v331
        %v381 = vunpack.c.h.b16 %v331
        %v382 = vunpack.c.l.b16 %v332
        %v383 = vunpack.c.h.b16 %v332
        %v384 = vunpack.c.l.b16 %v333
        %v385 = vunpack.c.h.b16 %v333
        %v386 = vunpack.c.l.b16 %v334
        %v387 = vunpack.c.h.b16 %v334
        %v388 = vunpack.c.l.b16 %v335
        %v389 = vunpack.c.h.b16 %v335
        %v390 = vunpack.c.l.b16 %v336
        %v391 = vunpack.c.h.b16 %v336
        %v392 = vunpack.c.l.b16 %v337
        %v393 = vunpack.c.h.b16 %v337
        %v394 = vunpack.c.l.b16 %v338
        %v395 = vunpack.c.h.b16 %v338
        %v396 = vunpack.c.l.b16 %v339
        %v397 = vunpack.c.h.b16 %v339
        %v398 = vunpack.c.l.b16 %v340
        %v399 = vunpack.c.h.b16 %v340
        %v400 = vunpack.c.l.b16 %v341
        %v401 = vunpack.c.h.b16 %v341
        %v402 = vpack.c.b16 %v372, %v370
        %v403 = vpack.c.b16 %v373, %v371
        %v404 = vpack.c.b16 %v376, %v374
        %v405 = vpack.c.b16 %v377, %v375
        %v406 = vpack.c.b16 %v380, %v378
        %v407 = vpack.c.b16 %v381, %v379
        %v408 = vpack.c.b16 %v384, %v382
        %v409 = vpack.c.b16 %v385, %v383
        %v410 = vpack.c.b16 %v388, %v386
        %v411 = vpack.c.b16 %v389, %v387
        %v412 = vpack.c.b16 %v392, %v390
        %v413 = vpack.c.b16 %v393, %v391
        %v414 = vpack.c.b16 %v396, %v394
        %v415 = vpack.c.b16 %v397, %v395
        %v416 = vpack.c.b16 %v400, %v398
        %v417 = vpack.c.b16 %v401, %v399
        %434 = vmatprep.subr.bf16.mxu0 %v403
        %435 = vmatpush1.bf16.msra.mxu0 %v402
        %436 = vmatprep.subr.bf16.mxu0 %v405
        %437 = vmatpush1.bf16.msra.mxu0 %v404
        %438 = vmatprep.subr.bf16.mxu0 %v407
        %439 = vmatpush1.bf16.msra.mxu0 %v406
        %440 = vmatprep.subr.bf16.mxu0 %v409
        %441 = vmatpush1.bf16.msra.mxu0 %v408
        %442 = vmatprep.subr.bf16.mxu0 %v411
        %443 = vmatpush1.bf16.msra.mxu0 %v410
        %444 = vmatprep.subr.bf16.mxu0 %v413
        %445 = vmatpush1.bf16.msra.mxu0 %v412
        %446 = vmatprep.subr.bf16.mxu0 %v415
        %447 = vmatpush1.bf16.msra.mxu0 %v414
        %448 = vmatprep.subr.bf16.mxu0 %v417
        %449 = vmatpush1.bf16.msra.mxu0 %v416
        %450 = vmatprep.subr.bf16.mxu0 0
        %451 = vmatpush1.bf16.msra.mxu0 0
        %452 = vmatprep.subr.bf16.mxu0 0
        %453 = vmatpush1.bf16.msra.mxu0 0
        %454 = vmatprep.subr.bf16.mxu0 0
        %455 = vmatpush1.bf16.msra.mxu0 0
        %456 = vmatprep.subr.bf16.mxu0 0
        %457 = vmatpush1.bf16.msra.mxu0 0
        %458 = vmatprep.subr.bf16.mxu0 0
        %459 = vmatpush1.bf16.msra.mxu0 0
        %460 = vmatprep.subr.bf16.mxu0 0
        %461 = vmatpush1.bf16.msra.mxu0 0
        %462 = vmatprep.subr.bf16.mxu0 0
        %463 = vmatpush1.bf16.msra.mxu0 0
        %464 = vmatprep.subr.bf16.mxu0 0
        %465 = vmatpush1.bf16.msra.mxu0 0
        %466 = vmatprep.mubr.bf16.mxu0 0
        %467 = vmatmul.mubr.bf16.gmra.mrb[0].mxu0 %v325
        %v468 = vpop.f32.mrb[0].mxu0
        %v469 = vadd.f32 %v347, %v468
        %v470 = vpop.f32.mrb[0].mxu0
        %v471 = vadd.f32 %v351, %v470
        %v472 = vpop.f32.mrb[0].mxu0
        %v473 = vpop.f32.mrb[0].mxu0
        %474 = vdwg.mxu0
        %v475 = vmul.f32 %v469, 0.5
        %v476 = vmul.f32 %v471, 0.5
        %v477 = vmul.f32 %v469, 0.70710677
        %v478 = vmul.f32 %v471, 0.70710677
        %v479 = vand.u32 2147483647, %v477
        %v480 = vand.u32 2147483647, %v478
        %v481 = vmul.f32 %v479, 0.3275911
        %v482 = vmul.f32 %v480, 0.3275911
        %v483 = vadd.f32 %v481, 1.0
        %v484 = vadd.f32 %v482, 1.0
        %v485 = vrcp.pop %v483
        %v486 = vrcp.pop %v484
        %v487 = vmul.f32 %v485, 1.0614054
        %v488 = vmul.f32 %v486, 1.0614054
        %v489 = vadd.f32 %v487, -1.4531521
        %v490 = vadd.f32 %v488, -1.4531521
        %v491 = vmul.f32 %v485, %v489
        %v492 = vmul.f32 %v486, %v490
        %v493 = vadd.f32 %v491, 1.4214138
        %v494 = vadd.f32 %v492, 1.4214138
        %v495 = vmul.f32 %v485, %v493
        %v496 = vmul.f32 %v486, %v494
        %v497 = vadd.f32 %v495, -0.28449672
        %v498 = vadd.f32 %v496, -0.28449672
        %v499 = vmul.f32 %v485, %v497
        %v500 = vmul.f32 %v486, %v498
        %v501 = vadd.f32 %v499, 0.2548296
        %v502 = vadd.f32 %v500, 0.2548296
        %v503 = vmul.f32 %v485, %v501
        %v504 = vmul.f32 %v486, %v502
        %v505 = vsub.f32 0.0, %v479
        %v506 = vsub.f32 0.0, %v480
        %v507 = vmul.f32 %v505, %v479
        %v508 = vmul.f32 %v506, %v480
        %v509 = vmul.f32 %v507, 1.442695
        %v510 = vpow.pop %v509
        %v511 = vmul.f32 %v508, 1.442695
        %v512 = vpow.pop %v511
        %v513 = vmul.f32 %v503, %v510
        %v514 = vmul.f32 %v504, %v512
        %v515 = vsub.f32 1.0, %v513
        %v516 = vsub.f32 1.0, %v514
        %vm517 = vcmp.lt.f32.partialorder %v477, 0.0
        %vm518 = vcmp.lt.f32.partialorder %v478, 0.0
        %v519 = vsub.f32 0.0, %v515
        %v520 = vsub.f32 0.0, %v516
        %v521 = vsel %vm517, %v519, %v515
        %v522 = vsel %vm518, %v520, %v516
        %v523 = vadd.f32 %v521, 1.0
        %v524 = vadd.f32 %v522, 1.0
        %v525 = vmul.f32 %v475, %v523
        %v526 = vmul.f32 %v476, %v524
        %v527 = vld [vmem:[#allocation2] sm:$0xff]
        %v528 = vpack.c.bf16 %v525, %v525
        %v529 = vpack.c.bf16 %v526, %v526
        %v530 = vld [vmem:[#allocation8] sm:$0xf]
        %v531 = vld [vmem:[#allocation8 + $0x4] sm:$0xf]
        %v532 = vld [vmem:[#allocation8 + $0x8] sm:$0xf]
        %v533 = vld [vmem:[#allocation8 + $0xc] sm:$0xf]
        %v534 = vld [vmem:[#allocation8 + $0x10] sm:$0xf]
        %v535 = vld [vmem:[#allocation8 + $0x14] sm:$0xf]
        %v536 = vld [vmem:[#allocation8 + $0x18] sm:$0xf]
        %v537 = vld [vmem:[#allocation8 + $0x1c] sm:$0xf]
        %v538 = vld [vmem:[#allocation8 + $0x20] sm:$0xf]
        %v539 = vld [vmem:[#allocation8 + $0x24] sm:$0xf]
        %v540 = vld [vmem:[#allocation8 + $0x28] sm:$0xf]
        %v541 = vld [vmem:[#allocation8 + $0x2c] sm:$0xf]
        %v542 = vld [vmem:[#allocation8 + $0x30] sm:$0xf]
        %v543 = vld [vmem:[#allocation8 + $0x34] sm:$0xf]
        %v544 = vld [vmem:[#allocation8 + $0x38] sm:$0xf]
        %v545 = vld [vmem:[#allocation8 + $0x3c] sm:$0xf]
        %v546 = vld [vmem:[#allocation8 + $0x40] sm:$0xf]
        %v547 = vld [vmem:[#allocation8 + $0x44] sm:$0xf]
        %v548 = vld [vmem:[#allocation8 + $0x48] sm:$0xf]
        %v549 = vld [vmem:[#allocation8 + $0x4c] sm:$0xf]
        %v550 = vld [vmem:[#allocation8 + $0x50] sm:$0xf]
        %v551 = vld [vmem:[#allocation8 + $0x54] sm:$0xf]
        %v552 = vld [vmem:[#allocation8 + $0x58] sm:$0xf]
        %v553 = vld [vmem:[#allocation8 + $0x5c] sm:$0xf]
        %v554 = vld [vmem:[#allocation8 + $0x60] sm:$0xf]
        %v555 = vld [vmem:[#allocation8 + $0x64] sm:$0xf]
        %v556 = vld [vmem:[#allocation8 + $0x68] sm:$0xf]
        %v557 = vld [vmem:[#allocation8 + $0x6c] sm:$0xf]
        %v558 = vld [vmem:[#allocation8 + $0x70] sm:$0xf]
        %v559 = vld [vmem:[#allocation8 + $0x74] sm:$0xf]
        %v560 = vld [vmem:[#allocation8 + $0x78] sm:$0xf]
        %v561 = vld [vmem:[#allocation8 + $0x7c] sm:$0xf]
        %v594 = vunpack.c.l.b16 %v530
        %v595 = vunpack.c.l.b16 %v531
        %v596 = vunpack.c.l.b16 %v532
        %v597 = vunpack.c.l.b16 %v533
        %v598 = vunpack.c.l.b16 %v534
        %v599 = vunpack.c.l.b16 %v535
        %v600 = vunpack.c.l.b16 %v536
        %v601 = vunpack.c.l.b16 %v537
        %v602 = vunpack.c.l.b16 %v538
        %v603 = vunpack.c.l.b16 %v539
        %v604 = vunpack.c.l.b16 %v540
        %v605 = vunpack.c.l.b16 %v541
        %v606 = vunpack.c.l.b16 %v542
        %v607 = vunpack.c.l.b16 %v543
        %v608 = vunpack.c.l.b16 %v544
        %v609 = vunpack.c.l.b16 %v545
        %v610 = vunpack.c.l.b16 %v546
        %v611 = vunpack.c.l.b16 %v547
        %v612 = vunpack.c.l.b16 %v548
        %v613 = vunpack.c.l.b16 %v549
        %v614 = vunpack.c.l.b16 %v550
        %v615 = vunpack.c.l.b16 %v551
        %v616 = vunpack.c.l.b16 %v552
        %v617 = vunpack.c.l.b16 %v553
        %v618 = vunpack.c.l.b16 %v554
        %v619 = vunpack.c.l.b16 %v555
        %v620 = vunpack.c.l.b16 %v556
        %v621 = vunpack.c.l.b16 %v557
        %v622 = vunpack.c.l.b16 %v558
        %v623 = vunpack.c.l.b16 %v559
        %v624 = vunpack.c.l.b16 %v560
        %v625 = vunpack.c.l.b16 %v561
        %v626 = vpack.c.b16 %v595, %v594
        %v627 = vpack.c.b16 %v597, %v596
        %v628 = vpack.c.b16 %v599, %v598
        %v629 = vpack.c.b16 %v601, %v600
        %v630 = vpack.c.b16 %v603, %v602
        %v631 = vpack.c.b16 %v605, %v604
        %v632 = vpack.c.b16 %v607, %v606
        %v633 = vpack.c.b16 %v609, %v608
        %v634 = vpack.c.b16 %v611, %v610
        %v635 = vpack.c.b16 %v613, %v612
        %v636 = vpack.c.b16 %v615, %v614
        %v637 = vpack.c.b16 %v617, %v616
        %v638 = vpack.c.b16 %v619, %v618
        %v639 = vpack.c.b16 %v621, %v620
        %v640 = vpack.c.b16 %v623, %v622
        %v641 = vpack.c.b16 %v625, %v624
        %658 = vmatprep.subr.bf16.mxu0 0
        %659 = vmatpush1.bf16.msra.mxu0 %v626
        %660 = vmatprep.subr.bf16.mxu0 0
        %661 = vmatpush1.bf16.msra.mxu0 %v627
        %662 = vmatprep.subr.bf16.mxu0 0
        %663 = vmatpush1.bf16.msra.mxu0 %v628
        %664 = vmatprep.subr.bf16.mxu0 0
        %665 = vmatpush1.bf16.msra.mxu0 %v629
        %666 = vmatprep.subr.bf16.mxu0 0
        %667 = vmatpush1.bf16.msra.mxu0 %v630
        %668 = vmatprep.subr.bf16.mxu0 0
        %669 = vmatpush1.bf16.msra.mxu0 %v631
        %670 = vmatprep.subr.bf16.mxu0 0
        %671 = vmatpush1.bf16.msra.mxu0 %v632
        %672 = vmatprep.subr.bf16.mxu0 0
        %673 = vmatpush1.bf16.msra.mxu0 %v633
        %674 = vmatprep.subr.bf16.mxu0 0
        %675 = vmatpush1.bf16.msra.mxu0 %v634
        %676 = vmatprep.subr.bf16.mxu0 0
        %677 = vmatpush1.bf16.msra.mxu0 %v635
        %678 = vmatprep.subr.bf16.mxu0 0
        %679 = vmatpush1.bf16.msra.mxu0 %v636
        %680 = vmatprep.subr.bf16.mxu0 0
        %681 = vmatpush1.bf16.msra.mxu0 %v637
        %682 = vmatprep.subr.bf16.mxu0 0
        %683 = vmatpush1.bf16.msra.mxu0 %v638
        %684 = vmatprep.subr.bf16.mxu0 0
        %685 = vmatpush1.bf16.msra.mxu0 %v639
        %686 = vmatprep.subr.bf16.mxu0 0
        %687 = vmatpush1.bf16.msra.mxu0 %v640
        %688 = vmatprep.subr.bf16.mxu0 0
        %689 = vmatpush1.bf16.msra.mxu0 %v641
        %690 = vmatprep.mubr.bf16.mxu0 %v529
        %691 = vmatmul.mubr.bf16.gmra.mrb[0].mxu0 %v528
        %v692 = vpop.f32.mrb[0].mxu0
        %v693 = vadd.f32 0.0, %v692
        %v694 = vpop.f32.mrb[0].mxu0
        %v695 = vpop.f32.mrb[0].mxu0
        %v696 = vpop.f32.mrb[0].mxu0
        %697 = vdwg.mxu0
        %v698 = vadd.f32 %v527, %v693
        %699 = vst [vmem:[#allocation2] sm:$0xff] %v698
        // Predicated region
        $region57: #{tpu_custom_call.1} parent=39 // pred_check
          %p700 = pneg %p319
        $region58: #{tpu_custom_call.1} parent=39 // pred_check_branch
          %702 = sbr.rel (%p700) target = $region60
        $region59: #{tpu_custom_call.1} parent=39 // pred_region
          %v703 = vld [vmem:[#allocation2] sm:$0xff]
          %v704 = vld [vmem:[%s4] sm:$0x1]
          %v706 = vlaneseq
          %v707 = vshrl.u32 %v706, 7
          %v708 = vsub.s32 0, %v707
          %v709 = vrot.slane %v704, %v708
          %v711 = vadd.f32 %v703, %v709
          %712 = vst [vmem:[%s310] sm:$0xff] %v711
        $region60: #{tpu_custom_call.1} parent=39 // pred_fallthru
          _
        %s713 = sand.u32 %s168, 1
        %s714 = scalar_lea.sflag [#allocation5], %s713
        %s715 = sand.u32 %s168, 1
        %s716 = smul.addr %s715, 8
        %s717 = scalar_lea.vmem [#allocation9], %s716
        // Predicated region
        $region61: #{tpu_custom_call.1} parent=39 // pred_check
          %p718 = pneg %p178
        $region62: #{tpu_custom_call.1} parent=39 // pred_check_branch
          %720 = sbr.rel (%p718) target = $region64
        $region63: #{tpu_custom_call.1} parent=39 // pred_region
          %s722 = ssub.s32 128, 128
          %723 = vsyncadd %s714, %s722
          %s724 = smul.addr %s27, 128
          %s725 = scalar_lea.hbm %s5, %s724
          %s727 = sshll.u32 %s717, 4
          %s728 = int_to_ptr.vmem [resolvable:$true] %s727
          %730 = dma.vmem_to_hbm [thread:$0]  %s728, 128, %s725, %s714
        $region64: #{tpu_custom_call.1} parent=39 // pred_fallthru
          _
      $region40: #{tpu_custom_call.1} parent=5 // pred_fallthru
        _
      %p731 = scmp.le.s32.totalorder 2, %s18
      // Predicated region
      $region65: #{tpu_custom_call.1} parent=5 // pred_check
        %p732 = pneg %p731
      $region66: #{tpu_custom_call.1} parent=5 // pred_check_branch
        %734 = sbr.rel (%p732) target = $region68
      $region67: #{tpu_custom_call.1} parent=5 // pred_region
        %s735 = ssub.s32 %s18, 2
        // Predicated region
        $region69: #{tpu_custom_call.1} parent=67 // pred_check
          %p736 = pneg %p184
        $region70: #{tpu_custom_call.1} parent=67 // pred_check_branch
          %738 = sbr.rel (%p736) target = $region72
        $region71: #{tpu_custom_call.1} parent=67 // pred_region
          %s739 = sand.u32 %s169, 1
          %s740 = scalar_lea.sflag [#allocation5], %s739
          %s741 = sand.u32 %s169, 1
          %s742 = smul.addr %s741, 8
          %s743 = scalar_lea.vmem [#allocation9], %s742
          %744 = dma.done %s740, 128
        $region72: #{tpu_custom_call.1} parent=67 // pred_fallthru
          _
      $region68: #{tpu_custom_call.1} parent=5 // pred_fallthru
        _
    $region6: #{tpu_custom_call.1} parent=1 // loop_footer
      %s22 = sadd.s32 1, %s18
    $region7: #{tpu_custom_call.1} parent=1 // loop_footer_branch
      %17 = sbr.rel target = $region3
    $region8: #{tpu_custom_call.1} parent=1 // loop_exit
      _
    %745 = vsyncpa [#allocation4], 1
    %s746 = scalar_lea.sflag [#allocation4], 1
    %747 = vsyncpa %s746, 1
    %748 = vsyncpa [#allocation7], 1
    %749 = vsyncpa [#allocation5], 1
    %s750 = scalar_lea.sflag [#allocation5], 1
    %751 = vsyncpa %s750, 1

</llo_original>
